<compile_context>
chip_gen: v6e
topology: v6e:2x2x1
jax: 0.10.0
libtpu: 0.0.40
codegen_flags: <defaults>
</compile_context>

<pallas_src>
import jax
import jax.numpy as jnp
from jax.experimental import pallas as pl
from jax.experimental.pallas import tpu as pltpu


def _round_up(x, m):
    return (x + m - 1) // m * m


def _choose_tile_b(B, tile_b_max=1024):
    """Pick the batch tile: a multiple of 16 sublanes, <= tile_b_max, with
    minimal batch padding waste; when the grid has >1 step, prefer an even
    step count (v7x megacore shards the 'parallel' axis across 2 TCs)."""
    if B <= tile_b_max:
        # Single grid step; just round to the sublane multiple.
        return _round_up(B, 16)
    best_key, best_tile = None, tile_b_max
    for cand in range(tile_b_max, 15, -16):
        b_pad = _round_up(B, cand)
        pad = b_pad - B
        steps = b_pad // cand
        # Minimize padding first, then prefer an even step count, then the
        # largest tile (fewest grid steps -> least per-step fixed overhead).
        key = (pad, steps % 2, -cand)
        if best_key is None or key < best_key:
            best_key, best_tile = key, cand
        if pad == 0 and steps % 2 == 0:
            break
    return best_tile


def gcn_linear_kernel(x_ref,
                      w1_ref, b1_ref,
                      w2_ref, b2_ref,
                      w3_ref, b3_ref,
                      w4_ref, b4_ref,
                      o_ref):
    # x arrives as f32 and is cast to bf16 in-kernel (cheap VPU work; avoids a
    # separate wrapper-side HBM cast pass). Matmuls run bf16 on the MXU with
    # f32 accumulation; bias add + ReLU stay in f32 on the VPU; inter-layer
    # activations are materialized as bf16 to halve VMEM/vreg traffic.
    h = x_ref[...].astype(jnp.bfloat16)

    h = jnp.dot(h, w1_ref[...], preferred_element_type=jnp.float32)
    h = jnp.maximum(h + b1_ref[...], 0.0).astype(jnp.bfloat16)

    h = jnp.dot(h, w2_ref[...], preferred_element_type=jnp.float32)
    h = jnp.maximum(h + b2_ref[...], 0.0).astype(jnp.bfloat16)

    h = jnp.dot(h, w3_ref[...], preferred_element_type=jnp.float32)
    h = jnp.maximum(h + b3_ref[...], 0.0).astype(jnp.bfloat16)

    h = jnp.dot(h, w4_ref[...], preferred_element_type=jnp.float32)
    h = jnp.maximum(h + b4_ref[...], 0.0)   # PyTorch module applies ReLU on fc4 too.

    o_ref[...] = h.astype(o_ref.dtype)


def gcn_linear_forward(x, params, *, tile_b_max=1024):
    """x: (B, input_dim) float32. params: w1..w4 stored (in,out); b1..b4 (1,out)."""
    B, in_dim = x.shape
    out_dim = params["w4"].shape[1]

    tile_b = _choose_tile_b(B, tile_b_max)
    b_pad = _round_up(B, tile_b)

    # Pad batch only when needed (skips an HBM pass when B % tile_b == 0).
    x_p = x if b_pad == B else jnp.pad(x, ((0, b_pad - B), (0, 0)))

    ordered = [
        params["w1"].astype(jnp.bfloat16), params["b1"].astype(jnp.float32),
        params["w2"].astype(jnp.bfloat16), params["b2"].astype(jnp.float32),
        params["w3"].astype(jnp.bfloat16), params["b3"].astype(jnp.float32),
        params["w4"].astype(jnp.bfloat16), params["b4"].astype(jnp.float32),
    ]

    def full_spec(arr):
        nd = arr.ndim
        return pl.BlockSpec(arr.shape, lambda i, _nd=nd: (0,) * _nd)

    in_specs = [pl.BlockSpec((tile_b, in_dim), lambda i: (i, 0))]
    in_specs += [full_spec(a) for a in ordered]
    # Output block's last dim equals the full array dim (legal even though
    # out_dim < 128): no 128-lane padding, no wrapper feature-dim slice, and an
    # 8x smaller output HBM stream for out_dim=16.
    out_spec = pl.BlockSpec((tile_b, out_dim), lambda i: (i, 0))

    out = pl.pallas_call(
        gcn_linear_kernel,
        out_shape=jax.ShapeDtypeStruct((b_pad, out_dim), jnp.float32),
        grid_spec=pltpu.PrefetchScalarGridSpec(
            num_scalar_prefetch=0,
            grid=(b_pad // tile_b,),
            in_specs=in_specs,
            out_specs=out_spec,
        ),
        compiler_params=pltpu.CompilerParams(
            dimension_semantics=("parallel",),
            vmem_limit_bytes=32 * 1024 * 1024,
        ),
    )(x_p, *ordered)

    return out if b_pad == B else out[:B]


def init_params(key, input_dim, hidden_dim, output_dim):
    """Deterministic synthetic init. Weights stored as (in, out); biases (1, out)."""
    dims = [(input_dim, hidden_dim), (hidden_dim, 256), (256, 64), (64, output_dim)]
    params = {}
    keys = jax.random.split(key, 2 * len(dims))
    for idx, (din, dout) in enumerate(dims):
        bound = 1.0 / (din ** 0.5)   # nn.Linear default-ish scale
        w = jax.random.uniform(keys[2 * idx], (din, dout), jnp.float32, -bound, bound)
        b = jax.random.uniform(keys[2 * idx + 1], (1, dout), jnp.float32, -bound, bound)
        params[f"w{idx + 1}"] = w
        params[f"b{idx + 1}"] = b
    return params


def reference_forward(x, params, *, use_bf16=True):
    """Pure-JAX reference. With use_bf16=True it mirrors the kernel's casts."""
    cast = (lambda a: a.astype(jnp.bfloat16)) if use_bf16 else (lambda a: a)
    h = cast(x)
    for i in range(1, 5):
        h = jnp.dot(h, cast(params[f"w{i}"]),
                    preferred_element_type=jnp.float32) + params[f"b{i}"]
        h = jnp.maximum(h, 0.0)
        if i < 4:
            h = cast(h)
    return h


if __name__ == "__main__":
    key = jax.random.PRNGKey(0)
    k_params, k_x = jax.random.split(key)

    batch = 8
    input_dim = 32
    hidden_dim = 128
    output_dim = 16

    params = init_params(k_params, input_dim, hidden_dim, output_dim)
    x = jax.random.normal(k_x, (batch, input_dim), jnp.float32)

    out = jax.block_until_ready(gcn_linear_forward(x, params))
    assert out.shape == (batch, output_dim)

    # Tight check vs a reference with identical bf16 casts / f32 accumulation.
    ref_bf16 = reference_forward(x, params, use_bf16=True)
    assert jnp.allclose(out, ref_bf16, atol=1e-3, rtol=1e-3), "mismatch vs bf16 ref"

    # Loose check vs the full-f32 reference (bf16 quantization error only).
    # TODO(synk): if the bf16 accuracy budget is unacceptable, keep x/layer-1 in f32.
    ref_f32 = reference_forward(x, params, use_bf16=False)
    assert jnp.allclose(out, ref_f32, atol=5e-2, rtol=5e-2), "mismatch vs f32 ref"

    print("KERNEL_OK")
</pallas_src>

<mosaic_0001>
module attributes {stable_mosaic.version = 11 : i64} {
  func.func @gcn_linear_kernel(%arg0: i32, %arg1: memref<16x32xf32, #tpu.memory_space<vmem>>, %arg2: memref<32x128xbf16, #tpu.memory_space<vmem>>, %arg3: memref<1x128xf32, #tpu.memory_space<vmem>>, %arg4: memref<128x256xbf16, #tpu.memory_space<vmem>>, %arg5: memref<1x256xf32, #tpu.memory_space<vmem>>, %arg6: memref<256x64xbf16, #tpu.memory_space<vmem>>, %arg7: memref<1x64xf32, #tpu.memory_space<vmem>>, %arg8: memref<64x16xbf16, #tpu.memory_space<vmem>>, %arg9: memref<1x16xf32, #tpu.memory_space<vmem>>, %arg10: memref<16x16xf32, #tpu.memory_space<vmem>>) attributes {dimension_semantics = [#tpu.dimension_semantics<parallel>], iteration_bounds = array<i64: 1>, scalar_prefetch = 0 : i64, scratch_operands = 0 : i64, tpu.core_type = #tpu.core_type<tc>, window_params = [{transform_indices = @transform_0, window_bounds = array<i64: 16, 32>}, {pipeline_mode = #tpu.pipeline_mode<synchronous>, transform_indices = @transform_1, window_bounds = array<i64: 32, 128>}, {pipeline_mode = #tpu.pipeline_mode<synchronous>, transform_indices = @transform_2, window_bounds = array<i64: 1, 128>}, {pipeline_mode = #tpu.pipeline_mode<synchronous>, transform_indices = @transform_3, window_bounds = array<i64: 128, 256>}, {pipeline_mode = #tpu.pipeline_mode<synchronous>, transform_indices = @transform_4, window_bounds = array<i64: 1, 256>}, {pipeline_mode = #tpu.pipeline_mode<synchronous>, transform_indices = @transform_5, window_bounds = array<i64: 256, 64>}, {pipeline_mode = #tpu.pipeline_mode<synchronous>, transform_indices = @transform_6, window_bounds = array<i64: 1, 64>}, {pipeline_mode = #tpu.pipeline_mode<synchronous>, transform_indices = @transform_7, window_bounds = array<i64: 64, 16>}, {pipeline_mode = #tpu.pipeline_mode<synchronous>, transform_indices = @transform_8, window_bounds = array<i64: 1, 16>}, {transform_indices = @transform_9, window_bounds = array<i64: 16, 16>}]} {
    %c0 = arith.constant 0 : index
    %c0_0 = arith.constant 0 : index
    %0 = vector.load %arg1[%c0, %c0_0] : memref<16x32xf32, #tpu.memory_space<vmem>>, vector<16x32xf32>
    %1 = arith.truncf %0 : vector<16x32xf32> to vector<16x32xbf16>
    %c0_1 = arith.constant 0 : index
    %c0_2 = arith.constant 0 : index
    %2 = vector.load %arg2[%c0_1, %c0_2] : memref<32x128xbf16, #tpu.memory_space<vmem>>, vector<32x128xbf16>
    %cst = arith.constant dense<0.000000e+00> : vector<16x128xf32>
    %3 = tpu.matmul %1, %2, %cst {dimension_numbers = #tpu.dot_dimension_numbers<[1], [0], [0], [1], [0, 0, 1, 1], [], []>} : vector<16x32xbf16>, vector<32x128xbf16>, vector<16x128xf32> -> vector<16x128xf32>
    %c0_3 = arith.constant 0 : index
    %c0_4 = arith.constant 0 : index
    %4 = vector.load %arg3[%c0_3, %c0_4] : memref<1x128xf32, #tpu.memory_space<vmem>>, vector<1x128xf32>
    %5 = vector.broadcast %4 : vector<1x128xf32> to vector<16x128xf32>
    %6 = arith.addf %3, %5 : vector<16x128xf32>
    %cst_5 = arith.constant 0.000000e+00 : f32
    %7 = vector.broadcast %cst_5 : f32 to vector<16x128xf32>
    %8 = arith.maximumf %6, %7 : vector<16x128xf32>
    %9 = arith.truncf %8 : vector<16x128xf32> to vector<16x128xbf16>
    %c0_6 = arith.constant 0 : index
    %c0_7 = arith.constant 0 : index
    %10 = vector.load %arg4[%c0_6, %c0_7] : memref<128x256xbf16, #tpu.memory_space<vmem>>, vector<128x256xbf16>
    %cst_8 = arith.constant dense<0.000000e+00> : vector<16x256xf32>
    %11 = tpu.matmul %9, %10, %cst_8 {dimension_numbers = #tpu.dot_dimension_numbers<[1], [0], [0], [1], [0, 0, 1, 1], [], []>} : vector<16x128xbf16>, vector<128x256xbf16>, vector<16x256xf32> -> vector<16x256xf32>
    %c0_9 = arith.constant 0 : index
    %c0_10 = arith.constant 0 : index
    %12 = vector.load %arg5[%c0_9, %c0_10] : memref<1x256xf32, #tpu.memory_space<vmem>>, vector<1x256xf32>
    %13 = vector.broadcast %12 : vector<1x256xf32> to vector<16x256xf32>
    %14 = arith.addf %11, %13 : vector<16x256xf32>
    %cst_11 = arith.constant 0.000000e+00 : f32
    %15 = vector.broadcast %cst_11 : f32 to vector<16x256xf32>
    %16 = arith.maximumf %14, %15 : vector<16x256xf32>
    %17 = arith.truncf %16 : vector<16x256xf32> to vector<16x256xbf16>
    %c0_12 = arith.constant 0 : index
    %c0_13 = arith.constant 0 : index
    %18 = vector.load %arg6[%c0_12, %c0_13] : memref<256x64xbf16, #tpu.memory_space<vmem>>, vector<256x64xbf16>
    %cst_14 = arith.constant dense<0.000000e+00> : vector<16x64xf32>
    %19 = tpu.matmul %17, %18, %cst_14 {dimension_numbers = #tpu.dot_dimension_numbers<[1], [0], [0], [1], [0, 0, 1, 1], [], []>} : vector<16x256xbf16>, vector<256x64xbf16>, vector<16x64xf32> -> vector<16x64xf32>
    %c0_15 = arith.constant 0 : index
    %c0_16 = arith.constant 0 : index
    %20 = vector.load %arg7[%c0_15, %c0_16] : memref<1x64xf32, #tpu.memory_space<vmem>>, vector<1x64xf32>
    %21 = vector.broadcast %20 : vector<1x64xf32> to vector<16x64xf32>
    %22 = arith.addf %19, %21 : vector<16x64xf32>
    %cst_17 = arith.constant 0.000000e+00 : f32
    %23 = vector.broadcast %cst_17 : f32 to vector<16x64xf32>
    %24 = arith.maximumf %22, %23 : vector<16x64xf32>
    %25 = arith.truncf %24 : vector<16x64xf32> to vector<16x64xbf16>
    %c0_18 = arith.constant 0 : index
    %c0_19 = arith.constant 0 : index
    %26 = vector.load %arg8[%c0_18, %c0_19] : memref<64x16xbf16, #tpu.memory_space<vmem>>, vector<64x16xbf16>
    %cst_20 = arith.constant dense<0.000000e+00> : vector<16x16xf32>
    %27 = tpu.matmul %25, %26, %cst_20 {dimension_numbers = #tpu.dot_dimension_numbers<[1], [0], [0], [1], [0, 0, 1, 1], [], []>} : vector<16x64xbf16>, vector<64x16xbf16>, vector<16x16xf32> -> vector<16x16xf32>
    %c0_21 = arith.constant 0 : index
    %c0_22 = arith.constant 0 : index
    %28 = vector.load %arg9[%c0_21, %c0_22] : memref<1x16xf32, #tpu.memory_space<vmem>>, vector<1x16xf32>
    %29 = vector.broadcast %28 : vector<1x16xf32> to vector<16x16xf32>
    %30 = arith.addf %27, %29 : vector<16x16xf32>
    %cst_23 = arith.constant 0.000000e+00 : f32
    %31 = vector.broadcast %cst_23 : f32 to vector<16x16xf32>
    %32 = arith.maximumf %30, %31 : vector<16x16xf32>
    %c0_24 = arith.constant 0 : index
    %c0_25 = arith.constant 0 : index
    %33 = vector.load %arg10[%c0_24, %c0_25] : memref<16x16xf32, #tpu.memory_space<vmem>>, vector<16x16xf32>
    tpu.vector_store %arg10[%c0_24, %c0_25], %32 {strides = array<i32>} : memref<16x16xf32, #tpu.memory_space<vmem>>, vector<16x16xf32>,
    return
  }
  func.func @transform_0(%arg0: i32) -> (i32, i32) {
    %c0_i32 = arith.constant 0 : i32
    %c0_i32_0 = arith.constant 0 : i32
    return %arg0, %c0_i32 : i32, i32
  }
  func.func @transform_1(%arg0: i32) -> (i32, i32) {
    %c0_i32 = arith.constant 0 : i32
    %c0_i32_0 = arith.constant 0 : i32
    %c0_i32_1 = arith.constant 0 : i32
    return %c0_i32, %c0_i32_0 : i32, i32
  }
  func.func @transform_2(%arg0: i32) -> (i32, i32) {
    %c0_i32 = arith.constant 0 : i32
    %c0_i32_0 = arith.constant 0 : i32
    %c0_i32_1 = arith.constant 0 : i32
    return %c0_i32, %c0_i32_0 : i32, i32
  }
  func.func @transform_3(%arg0: i32) -> (i32, i32) {
    %c0_i32 = arith.constant 0 : i32
    %c0_i32_0 = arith.constant 0 : i32
    %c0_i32_1 = arith.constant 0 : i32
    return %c0_i32, %c0_i32_0 : i32, i32
  }
  func.func @transform_4(%arg0: i32) -> (i32, i32) {
    %c0_i32 = arith.constant 0 : i32
    %c0_i32_0 = arith.constant 0 : i32
    %c0_i32_1 = arith.constant 0 : i32
    return %c0_i32, %c0_i32_0 : i32, i32
  }
  func.func @transform_5(%arg0: i32) -> (i32, i32) {
    %c0_i32 = arith.constant 0 : i32
    %c0_i32_0 = arith.constant 0 : i32
    %c0_i32_1 = arith.constant 0 : i32
    return %c0_i32, %c0_i32_0 : i32, i32
  }
  func.func @transform_6(%arg0: i32) -> (i32, i32) {
    %c0_i32 = arith.constant 0 : i32
    %c0_i32_0 = arith.constant 0 : i32
    %c0_i32_1 = arith.constant 0 : i32
    return %c0_i32, %c0_i32_0 : i32, i32
  }
  func.func @transform_7(%arg0: i32) -> (i32, i32) {
    %c0_i32 = arith.constant 0 : i32
    %c0_i32_0 = arith.constant 0 : i32
    %c0_i32_1 = arith.constant 0 : i32
    return %c0_i32, %c0_i32_0 : i32, i32
  }
  func.func @transform_8(%arg0: i32) -> (i32, i32) {
    %c0_i32 = arith.constant 0 : i32
    %c0_i32_0 = arith.constant 0 : i32
    %c0_i32_1 = arith.constant 0 : i32
    return %c0_i32, %c0_i32_0 : i32, i32
  }
  func.func @transform_9(%arg0: i32) -> (i32, i32) {
    %c0_i32 = arith.constant 0 : i32
    %c0_i32_0 = arith.constant 0 : i32
    return %arg0, %c0_i32 : i32, i32
  }
}

</mosaic_0001>

<llo_original>
// kernel: tpu_custom_call.1
$region0: #{tpu_custom_call.1}
  #allocation0 [shape = 'u32[]', space=smem, size = 0x4, offset = 0x4, fixed_abs, tag = 'smem constant byte address 0x4 - core index']
  #allocation1 [shape = 'u32[144,128]{1,0:T(1,128)}', space=vmem, size = 0x12000, scoped, tag = 'internal scratch']
  %s0 = inlined_call_operand.vmem [shape: f32[16,32], index: 0, kind: input, shape index: {}]
  %s1 = inlined_call_operand.vmem [shape: bf16[32,128], index: 1, kind: input, shape index: {}]
  %s2 = inlined_call_operand.vmem [shape: f32[1,128], index: 2, kind: input, shape index: {}]
  %s3 = inlined_call_operand.vmem [shape: bf16[128,256], index: 3, kind: input, shape index: {}]
  %s4 = inlined_call_operand.vmem [shape: f32[1,256], index: 4, kind: input, shape index: {}]
  %s5 = inlined_call_operand.vmem [shape: bf16[256,64], index: 5, kind: input, shape index: {}]
  %s6 = inlined_call_operand.vmem [shape: f32[1,64], index: 6, kind: input, shape index: {}]
  %s7 = inlined_call_operand.vmem [shape: bf16[64,16], index: 7, kind: input, shape index: {}]
  %s8 = inlined_call_operand.vmem [shape: f32[1,16], index: 8, kind: input, shape index: {}]
  %s9 = inlined_call_operand.hbm [shape: f32[16,16], index: 9, kind: output, shape index: {}]
  %s10 = sld [smem:[#allocation0]]
  $region46: #{tpu_custom_call.1} parent=0
    _
  %s12 = ssub.s32 1, %s10
  %s13 = scalar_select 0, %s12, %s10
  $region1: #{tpu_custom_call.1} parent=0
    #allocation2 [shape = 'u8[8192]{0}', space=vmem, size = 0x2000, scoped, tag = 'output window, operand 0, single buffered']
    #allocation3 [shape = 's32[1]{0}', space=sflag, size = 0x4, scoped, tag = 'scoped memory for tpu_custom_call.1']
    %14 = vsyncpa [#allocation3], 0
    // Predicated region
    $region2: #{tpu_custom_call.1} parent=1 // pred_check
      _
    $region3: #{tpu_custom_call.1} parent=1 // pred_check_branch
      %16 = sbr.rel (0) target = $region5
    $region4: #{tpu_custom_call.1} parent=1 // pred_region
      _
    $region5: #{tpu_custom_call.1} parent=1 // pred_fallthru
      _
    // Predicated region
    $region6: #{tpu_custom_call.1} parent=1 // pred_check
      _
    $region7: #{tpu_custom_call.1} parent=1 // pred_check_branch
      %18 = sbr.rel (0) target = $region9
    $region8: #{tpu_custom_call.1} parent=1 // pred_region
      _
    $region9: #{tpu_custom_call.1} parent=1 // pred_fallthru
      _
    // Predicated region
    $region10: #{tpu_custom_call.1} parent=1 // pred_check
      _
    $region11: #{tpu_custom_call.1} parent=1 // pred_check_branch
      %20 = sbr.rel (0) target = $region13
    $region12: #{tpu_custom_call.1} parent=1 // pred_region
      _
    $region13: #{tpu_custom_call.1} parent=1 // pred_fallthru
      _
    // Predicated region
    $region14: #{tpu_custom_call.1} parent=1 // pred_check
      _
    $region15: #{tpu_custom_call.1} parent=1 // pred_check_branch
      %22 = sbr.rel (0) target = $region17
    $region16: #{tpu_custom_call.1} parent=1 // pred_region
      _
    $region17: #{tpu_custom_call.1} parent=1 // pred_fallthru
      _
    // Predicated region
    $region18: #{tpu_custom_call.1} parent=1 // pred_check
      _
    $region19: #{tpu_custom_call.1} parent=1 // pred_check_branch
      %24 = sbr.rel (0) target = $region21
    $region20: #{tpu_custom_call.1} parent=1 // pred_region
      _
    $region21: #{tpu_custom_call.1} parent=1 // pred_fallthru
      _
    // Predicated region
    $region22: #{tpu_custom_call.1} parent=1 // pred_check
      _
    $region23: #{tpu_custom_call.1} parent=1 // pred_check_branch
      %26 = sbr.rel (0) target = $region25
    $region24: #{tpu_custom_call.1} parent=1 // pred_region
      _
    $region25: #{tpu_custom_call.1} parent=1 // pred_fallthru
      _
    // Predicated region
    $region26: #{tpu_custom_call.1} parent=1 // pred_check
      _
    $region27: #{tpu_custom_call.1} parent=1 // pred_check_branch
      %28 = sbr.rel (0) target = $region29
    $region28: #{tpu_custom_call.1} parent=1 // pred_region
      _
    $region29: #{tpu_custom_call.1} parent=1 // pred_fallthru
      _
    // Predicated region
    $region30: #{tpu_custom_call.1} parent=1 // pred_check
      _
    $region31: #{tpu_custom_call.1} parent=1 // pred_check_branch
      %30 = sbr.rel (0) target = $region33
    $region32: #{tpu_custom_call.1} parent=1 // pred_region
      _
    $region33: #{tpu_custom_call.1} parent=1 // pred_fallthru
      _
    // Predicated region
    $region34: #{tpu_custom_call.1} parent=1 // pred_check
      _
    $region35: #{tpu_custom_call.1} parent=1 // pred_check_branch
      %32 = sbr.rel (0) target = $region37
    $region36: #{tpu_custom_call.1} parent=1 // pred_region
      _
    $region37: #{tpu_custom_call.1} parent=1 // pred_fallthru
      _
    %v34 = vld [vmem:[%s0] sm:$0xff]
    %v35 = vld [vmem:[%s0 + $0x8] sm:$0xff]
    %v36 = vpack.c.bf16 %v35, %v34
    %v37 = vld [vmem:[%s1] sm:$0xf]
    %v38 = vld [vmem:[%s1 + $0x4] sm:$0xf]
    %v39 = vld [vmem:[%s1 + $0x8] sm:$0xf]
    %v40 = vld [vmem:[%s1 + $0xc] sm:$0xf]
    %v41 = vld [vmem:[%s2] sm:$0x1]
    %v43 = vlaneseq
    %v44 = vshrl.u32 %v43, 7
    %v45 = vsub.s32 0, %v44
    %v46 = vrot.slane %v41, %v45
    %v52 = vunpack.c.l.b16 %v37
    %v53 = vunpack.c.l.b16 %v38
    %v54 = vunpack.c.l.b16 %v39
    %v55 = vunpack.c.l.b16 %v40
    %v56 = vpack.c.b16 %v53, %v52
    %v57 = vpack.c.b16 %v55, %v54
    %vm60 = vcmask 261120
    %v62 = vsel %vm60, %v36, 0
    %64 = vmatprep.subr.bf16.mxu0 0
    %65 = vmatpush1.bf16.msra.mxu0 0
    %66 = vmatprep.subr.bf16.mxu0 0
    %67 = vmatpush1.bf16.msra.mxu0 0
    %68 = vmatprep.subr.bf16.mxu0 0
    %69 = vmatpush1.bf16.msra.mxu0 0
    %70 = vmatprep.subr.bf16.mxu0 0
    %71 = vmatpush1.bf16.msra.mxu0 0
    %72 = vmatprep.subr.bf16.mxu0 0
    %73 = vmatpush1.bf16.msra.mxu0 0
    %74 = vmatprep.subr.bf16.mxu0 0
    %75 = vmatpush1.bf16.msra.mxu0 0
    %76 = vmatprep.subr.bf16.mxu0 0
    %77 = vmatpush1.bf16.msra.mxu0 %v57
    %78 = vmatprep.subr.bf16.mxu0 0
    %79 = vmatpush1.bf16.msra.mxu0 %v56
    %80 = vmatprep.subr.bf16.mxu0 0
    %81 = vmatpush2.bf16.msra.mxu0 0
    %82 = vmatprep.subr.bf16.mxu0 0
    %83 = vmatpush2.bf16.msra.mxu0 0
    %84 = vmatprep.subr.bf16.mxu0 0
    %85 = vmatpush2.bf16.msra.mxu0 0
    %86 = vmatprep.subr.bf16.mxu0 0
    %87 = vmatpush2.bf16.msra.mxu0 0
    %88 = vmatprep.subr.bf16.mxu0 0
    %89 = vmatpush2.bf16.msra.mxu0 0
    %90 = vmatprep.subr.bf16.mxu0 0
    %91 = vmatpush2.bf16.msra.mxu0 0
    %92 = vmatprep.subr.bf16.mxu0 0
    %93 = vmatpush2.bf16.msra.mxu0 0
    %94 = vmatprep.subr.bf16.mxu0 0
    %95 = vmatpush2.bf16.msra.mxu0 0
    %96 = vmatprep.mubr.bf16.mxu0 0
    %97 = vmatmul.mubr.bf16.gmra.mxu0 %v62
    %v98 = vpop.f32.mrf.mxu0
    %v99 = vadd.f32 %v46, %v98
    %v100 = vpop.f32.mrf.mxu0
    %v101 = vpop.f32.mrf.mxu0
    %v102 = vadd.f32 %v46, %v101
    %v103 = vpop.f32.mrf.mxu0
    %104 = vdwg.mxu0
    %v105 = vmax.f32 %v99, 0.0
    %v106 = vmax.f32 %v102, 0.0
    %v107 = vpack.c.bf16 %v106, %v105
    %v108 = vld [vmem:[%s3] sm:$0xff]
    %v109 = vld [vmem:[%s3 + $0x8] sm:$0xff]
    %v110 = vld [vmem:[%s3 + $0x10] sm:$0xff]
    %v111 = vld [vmem:[%s3 + $0x18] sm:$0xff]
    %v112 = vld [vmem:[%s3 + $0x20] sm:$0xff]
    %v113 = vld [vmem:[%s3 + $0x28] sm:$0xff]
    %v114 = vld [vmem:[%s3 + $0x30] sm:$0xff]
    %v115 = vld [vmem:[%s3 + $0x38] sm:$0xff]
    %v116 = vld [vmem:[%s3 + $0x40] sm:$0xff]
    %v117 = vld [vmem:[%s3 + $0x48] sm:$0xff]
    %v118 = vld [vmem:[%s3 + $0x50] sm:$0xff]
    %v119 = vld [vmem:[%s3 + $0x58] sm:$0xff]
    %v120 = vld [vmem:[%s3 + $0x60] sm:$0xff]
    %v121 = vld [vmem:[%s3 + $0x68] sm:$0xff]
    %v122 = vld [vmem:[%s3 + $0x70] sm:$0xff]
    %v123 = vld [vmem:[%s3 + $0x78] sm:$0xff]
    %v124 = vld [vmem:[%s4] sm:$0x3]
    %v126 = vlaneseq
    %v127 = vshrl.u32 %v126, 7
    %v128 = vsub.s32 0, %v127
    %v129 = vrot.slane %v124, %v128
    %v130 = vlaneseq
    %v131 = vshrl.u32 %v130, 7
    %v132 = vsub.s32 1, %v131
    %v133 = vrot.slane %v124, %v132
    %v152 = vunpack.c.l.b16 %v108
    %v153 = vunpack.c.h.b16 %v108
    %v154 = vunpack.c.l.b16 %v109
    %v155 = vunpack.c.h.b16 %v109
    %v156 = vunpack.c.l.b16 %v110
    %v157 = vunpack.c.h.b16 %v110
    %v158 = vunpack.c.l.b16 %v111
    %v159 = vunpack.c.h.b16 %v111
    %v160 = vunpack.c.l.b16 %v112
    %v161 = vunpack.c.h.b16 %v112
    %v162 = vunpack.c.l.b16 %v113
    %v163 = vunpack.c.h.b16 %v113
    %v164 = vunpack.c.l.b16 %v114
    %v165 = vunpack.c.h.b16 %v114
    %v166 = vunpack.c.l.b16 %v115
    %v167 = vunpack.c.h.b16 %v115
    %v168 = vunpack.c.l.b16 %v116
    %v169 = vunpack.c.h.b16 %v116
    %v170 = vunpack.c.l.b16 %v117
    %v171 = vunpack.c.h.b16 %v117
    %v172 = vunpack.c.l.b16 %v118
    %v173 = vunpack.c.h.b16 %v118
    %v174 = vunpack.c.l.b16 %v119
    %v175 = vunpack.c.h.b16 %v119
    %v176 = vunpack.c.l.b16 %v120
    %v177 = vunpack.c.h.b16 %v120
    %v178 = vunpack.c.l.b16 %v121
    %v179 = vunpack.c.h.b16 %v121
    %v180 = vunpack.c.l.b16 %v122
    %v181 = vunpack.c.h.b16 %v122
    %v182 = vunpack.c.l.b16 %v123
    %v183 = vunpack.c.h.b16 %v123
    %v184 = vpack.c.b16 %v154, %v152
    %v185 = vpack.c.b16 %v155, %v153
    %v186 = vpack.c.b16 %v158, %v156
    %v187 = vpack.c.b16 %v159, %v157
    %v188 = vpack.c.b16 %v162, %v160
    %v189 = vpack.c.b16 %v163, %v161
    %v190 = vpack.c.b16 %v166, %v164
    %v191 = vpack.c.b16 %v167, %v165
    %v192 = vpack.c.b16 %v170, %v168
    %v193 = vpack.c.b16 %v171, %v169
    %v194 = vpack.c.b16 %v174, %v172
    %v195 = vpack.c.b16 %v175, %v173
    %v196 = vpack.c.b16 %v178, %v176
    %v197 = vpack.c.b16 %v179, %v177
    %v198 = vpack.c.b16 %v182, %v180
    %v199 = vpack.c.b16 %v183, %v181
    %216 = vmatprep.subr.bf16.mxu0 %v199
    %217 = vmatpush1.bf16.msra.mxu0 %v198
    %218 = vmatprep.subr.bf16.mxu0 %v197
    %219 = vmatpush1.bf16.msra.mxu0 %v196
    %220 = vmatprep.subr.bf16.mxu0 %v195
    %221 = vmatpush1.bf16.msra.mxu0 %v194
    %222 = vmatprep.subr.bf16.mxu0 %v193
    %223 = vmatpush1.bf16.msra.mxu0 %v192
    %224 = vmatprep.subr.bf16.mxu0 %v191
    %225 = vmatpush1.bf16.msra.mxu0 %v190
    %226 = vmatprep.subr.bf16.mxu0 %v189
    %227 = vmatpush1.bf16.msra.mxu0 %v188
    %228 = vmatprep.subr.bf16.mxu0 %v187
    %229 = vmatpush1.bf16.msra.mxu0 %v186
    %230 = vmatprep.subr.bf16.mxu0 %v185
    %231 = vmatpush1.bf16.msra.mxu0 %v184
    %232 = vmatprep.subr.bf16.mxu0 0
    %233 = vmatpush2.bf16.msra.mxu0 0
    %234 = vmatprep.subr.bf16.mxu0 0
    %235 = vmatpush2.bf16.msra.mxu0 0
    %236 = vmatprep.subr.bf16.mxu0 0
    %237 = vmatpush2.bf16.msra.mxu0 0
    %238 = vmatprep.subr.bf16.mxu0 0
    %239 = vmatpush2.bf16.msra.mxu0 0
    %240 = vmatprep.subr.bf16.mxu0 0
    %241 = vmatpush2.bf16.msra.mxu0 0
    %242 = vmatprep.subr.bf16.mxu0 0
    %243 = vmatpush2.bf16.msra.mxu0 0
    %244 = vmatprep.subr.bf16.mxu0 0
    %245 = vmatpush2.bf16.msra.mxu0 0
    %246 = vmatprep.subr.bf16.mxu0 0
    %247 = vmatpush2.bf16.msra.mxu0 0
    %248 = vmatprep.mubr.bf16.mxu0 0
    %249 = vmatmul.mubr.bf16.gmra.mxu0 %v107
    %v250 = vpop.f32.mrf.mxu0
    %v251 = vadd.f32 %v129, %v250
    %v252 = vpop.f32.mrf.mxu0
    %v253 = vadd.f32 %v133, %v252
    %v254 = vpop.f32.mrf.mxu0
    %v255 = vadd.f32 %v129, %v254
    %v256 = vpop.f32.mrf.mxu0
    %v257 = vadd.f32 %v133, %v256
    %258 = vdwg.mxu0
    %v259 = vmax.f32 %v251, 0.0
    %v260 = vmax.f32 %v253, 0.0
    %v261 = vmax.f32 %v255, 0.0
    %v262 = vmax.f32 %v257, 0.0
    %v263 = vpack.c.bf16 %v261, %v259
    %v264 = vpack.c.bf16 %v262, %v260
    %v265 = vld [vmem:[%s5] sm:$0xf]
    %v266 = vld [vmem:[%s5 + $0x4] sm:$0xf]
    %v267 = vld [vmem:[%s5 + $0x8] sm:$0xf]
    %v268 = vld [vmem:[%s5 + $0xc] sm:$0xf]
    %v269 = vld [vmem:[%s5 + $0x10] sm:$0xf]
    %v270 = vld [vmem:[%s5 + $0x14] sm:$0xf]
    %v271 = vld [vmem:[%s5 + $0x18] sm:$0xf]
    %v272 = vld [vmem:[%s5 + $0x1c] sm:$0xf]
    %v273 = vld [vmem:[%s5 + $0x20] sm:$0xf]
    %v274 = vld [vmem:[%s5 + $0x24] sm:$0xf]
    %v275 = vld [vmem:[%s5 + $0x28] sm:$0xf]
    %v276 = vld [vmem:[%s5 + $0x2c] sm:$0xf]
    %v277 = vld [vmem:[%s5 + $0x30] sm:$0xf]
    %v278 = vld [vmem:[%s5 + $0x34] sm:$0xf]
    %v279 = vld [vmem:[%s5 + $0x38] sm:$0xf]
    %v280 = vld [vmem:[%s5 + $0x3c] sm:$0xf]
    %v281 = vld [vmem:[%s5 + $0x40] sm:$0xf]
    %v282 = vld [vmem:[%s5 + $0x44] sm:$0xf]
    %v283 = vld [vmem:[%s5 + $0x48] sm:$0xf]
    %v284 = vld [vmem:[%s5 + $0x4c] sm:$0xf]
    %v285 = vld [vmem:[%s5 + $0x50] sm:$0xf]
    %v286 = vld [vmem:[%s5 + $0x54] sm:$0xf]
    %v287 = vld [vmem:[%s5 + $0x58] sm:$0xf]
    %v288 = vld [vmem:[%s5 + $0x5c] sm:$0xf]
    %v289 = vld [vmem:[%s5 + $0x60] sm:$0xf]
    %v290 = vld [vmem:[%s5 + $0x64] sm:$0xf]
    %v291 = vld [vmem:[%s5 + $0x68] sm:$0xf]
    %v292 = vld [vmem:[%s5 + $0x6c] sm:$0xf]
    %v293 = vld [vmem:[%s5 + $0x70] sm:$0xf]
    %v294 = vld [vmem:[%s5 + $0x74] sm:$0xf]
    %v295 = vld [vmem:[%s5 + $0x78] sm:$0xf]
    %v296 = vld [vmem:[%s5 + $0x7c] sm:$0xf]
    %v297 = vld [vmem:[%s6] sm:$0x1]
    %v299 = vlaneseq
    %v300 = vshrl.u32 %v299, 7
    %v301 = vsub.s32 0, %v300
    %v302 = vrot.slane %v297, %v301
    %v336 = vunpack.c.l.b16 %v265
    %v337 = vunpack.c.l.b16 %v266
    %v338 = vunpack.c.l.b16 %v267
    %v339 = vunpack.c.l.b16 %v268
    %v340 = vunpack.c.l.b16 %v269
    %v341 = vunpack.c.l.b16 %v270
    %v342 = vunpack.c.l.b16 %v271
    %v343 = vunpack.c.l.b16 %v272
    %v344 = vunpack.c.l.b16 %v273
    %v345 = vunpack.c.l.b16 %v274
    %v346 = vunpack.c.l.b16 %v275
    %v347 = vunpack.c.l.b16 %v276
    %v348 = vunpack.c.l.b16 %v277
    %v349 = vunpack.c.l.b16 %v278
    %v350 = vunpack.c.l.b16 %v279
    %v351 = vunpack.c.l.b16 %v280
    %v352 = vunpack.c.l.b16 %v281
    %v353 = vunpack.c.l.b16 %v282
    %v354 = vunpack.c.l.b16 %v283
    %v355 = vunpack.c.l.b16 %v284
    %v356 = vunpack.c.l.b16 %v285
    %v357 = vunpack.c.l.b16 %v286
    %v358 = vunpack.c.l.b16 %v287
    %v359 = vunpack.c.l.b16 %v288
    %v360 = vunpack.c.l.b16 %v289
    %v361 = vunpack.c.l.b16 %v290
    %v362 = vunpack.c.l.b16 %v291
    %v363 = vunpack.c.l.b16 %v292
    %v364 = vunpack.c.l.b16 %v293
    %v365 = vunpack.c.l.b16 %v294
    %v366 = vunpack.c.l.b16 %v295
    %v367 = vunpack.c.l.b16 %v296
    %v368 = vpack.c.b16 %v337, %v336
    %v369 = vpack.c.b16 %v339, %v338
    %v370 = vpack.c.b16 %v341, %v340
    %v371 = vpack.c.b16 %v343, %v342
    %v372 = vpack.c.b16 %v345, %v344
    %v373 = vpack.c.b16 %v347, %v346
    %v374 = vpack.c.b16 %v349, %v348
    %v375 = vpack.c.b16 %v351, %v350
    %v376 = vpack.c.b16 %v353, %v352
    %v377 = vpack.c.b16 %v355, %v354
    %v378 = vpack.c.b16 %v357, %v356
    %v379 = vpack.c.b16 %v359, %v358
    %v380 = vpack.c.b16 %v361, %v360
    %v381 = vpack.c.b16 %v363, %v362
    %v382 = vpack.c.b16 %v365, %v364
    %v383 = vpack.c.b16 %v367, %v366
    %400 = vmatprep.subr.bf16.mxu0 0
    %401 = vmatpush1.bf16.msra.mxu0 %v375
    %402 = vmatprep.subr.bf16.mxu0 0
    %403 = vmatpush1.bf16.msra.mxu0 %v374
    %404 = vmatprep.subr.bf16.mxu0 0
    %405 = vmatpush1.bf16.msra.mxu0 %v373
    %406 = vmatprep.subr.bf16.mxu0 0
    %407 = vmatpush1.bf16.msra.mxu0 %v372
    %408 = vmatprep.subr.bf16.mxu0 0
    %409 = vmatpush1.bf16.msra.mxu0 %v371
    %410 = vmatprep.subr.bf16.mxu0 0
    %411 = vmatpush1.bf16.msra.mxu0 %v370
    %412 = vmatprep.subr.bf16.mxu0 0
    %413 = vmatpush1.bf16.msra.mxu0 %v369
    %414 = vmatprep.subr.bf16.mxu0 0
    %415 = vmatpush1.bf16.msra.mxu0 %v368
    %416 = vmatprep.subr.bf16.mxu0 0
    %417 = vmatpush2.bf16.msra.mxu0 %v383
    %418 = vmatprep.subr.bf16.mxu0 0
    %419 = vmatpush2.bf16.msra.mxu0 %v382
    %420 = vmatprep.subr.bf16.mxu0 0
    %421 = vmatpush2.bf16.msra.mxu0 %v381
    %422 = vmatprep.subr.bf16.mxu0 0
    %423 = vmatpush2.bf16.msra.mxu0 %v380
    %424 = vmatprep.subr.bf16.mxu0 0
    %425 = vmatpush2.bf16.msra.mxu0 %v379
    %426 = vmatprep.subr.bf16.mxu0 0
    %427 = vmatpush2.bf16.msra.mxu0 %v378
    %428 = vmatprep.subr.bf16.mxu0 0
    %429 = vmatpush2.bf16.msra.mxu0 %v377
    %430 = vmatprep.subr.bf16.mxu0 0
    %431 = vmatpush2.bf16.msra.mxu0 %v376
    %432 = vmatprep.mubr.bf16.mxu0 %v264
    %433 = vmatmul.mubr.bf16.gmra.mxu0 %v263
    %v434 = vpop.f32.mrf.mxu0
    %v435 = vadd.f32 %v302, %v434
    %v436 = vpop.f32.mrf.mxu0
    %v437 = vpop.f32.mrf.mxu0
    %v438 = vadd.f32 %v302, %v437
    %v439 = vpop.f32.mrf.mxu0
    %440 = vdwg.mxu0
    %v441 = vmax.f32 %v435, 0.0
    %v442 = vmax.f32 %v438, 0.0
    %v443 = vpack.c.bf16 %v442, %v441
    %v444 = vld [vmem:[%s7] sm:$0xf]
    %v445 = vld [vmem:[%s7 + $0x4] sm:$0xf]
    %v446 = vld [vmem:[%s7 + $0x8] sm:$0xf]
    %v447 = vld [vmem:[%s7 + $0xc] sm:$0xf]
    %v448 = vld [vmem:[%s7 + $0x10] sm:$0xf]
    %v449 = vld [vmem:[%s7 + $0x14] sm:$0xf]
    %v450 = vld [vmem:[%s7 + $0x18] sm:$0xf]
    %v451 = vld [vmem:[%s7 + $0x1c] sm:$0xf]
    %v452 = vld [vmem:[%s8] sm:$0x1]
    %v454 = vlaneseq
    %v455 = vshrl.u32 %v454, 7
    %v456 = vsub.s32 0, %v455
    %v457 = vrot.slane %v452, %v456
    %v467 = vunpack.c.l.b16 %v444
    %v468 = vunpack.c.l.b16 %v445
    %v469 = vunpack.c.l.b16 %v446
    %v470 = vunpack.c.l.b16 %v447
    %v471 = vunpack.c.l.b16 %v448
    %v472 = vunpack.c.l.b16 %v449
    %v473 = vunpack.c.l.b16 %v450
    %v474 = vunpack.c.l.b16 %v451
    %v475 = vpack.c.b16 %v468, %v467
    %v476 = vpack.c.b16 %v470, %v469
    %v477 = vpack.c.b16 %v472, %v471
    %v478 = vpack.c.b16 %v474, %v473
    %vm483 = vcmask 523264
    %v485 = vsel %vm483, %v443, 0
    %487 = vmatprep.subr.bf16.mxu0 0
    %488 = vmatpush1.bf16.msra.mxu0 0
    %489 = vmatprep.subr.bf16.mxu0 0
    %490 = vmatpush1.bf16.msra.mxu0 0
    %491 = vmatprep.subr.bf16.mxu0 0
    %492 = vmatpush1.bf16.msra.mxu0 0
    %493 = vmatprep.subr.bf16.mxu0 0
    %494 = vmatpush1.bf16.msra.mxu0 0
    %495 = vmatprep.subr.bf16.mxu0 0
    %496 = vmatpush1.bf16.msra.mxu0 %v478
    %497 = vmatprep.subr.bf16.mxu0 0
    %498 = vmatpush1.bf16.msra.mxu0 %v477
    %499 = vmatprep.subr.bf16.mxu0 0
    %500 = vmatpush1.bf16.msra.mxu0 %v476
    %501 = vmatprep.subr.bf16.mxu0 0
    %502 = vmatpush1.bf16.msra.mxu0 %v475
    %503 = vmatprep.subr.bf16.mxu0 0
    %504 = vmatpush2.bf16.msra.mxu0 0
    %505 = vmatprep.subr.bf16.mxu0 0
    %506 = vmatpush2.bf16.msra.mxu0 0
    %507 = vmatprep.subr.bf16.mxu0 0
    %508 = vmatpush2.bf16.msra.mxu0 0
    %509 = vmatprep.subr.bf16.mxu0 0
    %510 = vmatpush2.bf16.msra.mxu0 0
    %511 = vmatprep.subr.bf16.mxu0 0
    %512 = vmatpush2.bf16.msra.mxu0 0
    %513 = vmatprep.subr.bf16.mxu0 0
    %514 = vmatpush2.bf16.msra.mxu0 0
    %515 = vmatprep.subr.bf16.mxu0 0
    %516 = vmatpush2.bf16.msra.mxu0 0
    %517 = vmatprep.subr.bf16.mxu0 0
    %518 = vmatpush2.bf16.msra.mxu0 0
    %519 = vmatprep.mubr.bf16.mxu0 0
    %520 = vmatmul.mubr.bf16.gmra.mxu0 %v485
    %v521 = vpop.f32.mrf.mxu0
    %v522 = vadd.f32 %v457, %v521
    %v523 = vpop.f32.mrf.mxu0
    %v524 = vpop.f32.mrf.mxu0
    %v525 = vadd.f32 %v457, %v524
    %v526 = vpop.f32.mrf.mxu0
    %527 = vdwg.mxu0
    %v528 = vmax.f32 %v522, 0.0
    %v529 = vmax.f32 %v525, 0.0
    %vm530 = vcmask 130048
    %531 = vst.msk [vmem:[#allocation2] sm:$0xff] %vm530, %v528
    %532 = vst.msk [vmem:[#allocation2 + $0x8] sm:$0xff] %vm530, %v529
    // Predicated region
    $region38: #{tpu_custom_call.1} parent=1 // pred_check
      _
    $region39: #{tpu_custom_call.1} parent=1 // pred_check_branch
      %534 = sbr.rel (0) target = $region41
    $region40: #{tpu_custom_call.1} parent=1 // pred_region
      %s536 = ssub.s32 256, 256
      %537 = vsyncadd [#allocation3], %s536
      %s538 = sshll.u32 [#allocation2], 4
      %s539 = int_to_ptr.vmem [resolvable:$true] %s538
      %544 = dma.vmem_to_hbm [thread:$0]  %s539, 256, %s9, [#allocation3], 128, 128, 8
    $region41: #{tpu_custom_call.1} parent=1 // pred_fallthru
      _
    // Predicated region
    $region42: #{tpu_custom_call.1} parent=1 // pred_check
      _
    $region43: #{tpu_custom_call.1} parent=1 // pred_check_branch
      %546 = sbr.rel (0) target = $region45
    $region44: #{tpu_custom_call.1} parent=1 // pred_region
      %547 = dma.done [#allocation3], 256
    $region45: #{tpu_custom_call.1} parent=1 // pred_fallthru
      _
    %548 = vsyncpa [#allocation3], 1

</llo_original>
